<compile_context>
chip_gen: v7x
topology: tpu7x:2x2x1
jax: 0.10.0
libtpu: 0.0.40
codegen_flags: <defaults>
</compile_context>

<pallas_src>
import random

import jax
import jax.numpy as jnp
from jax.experimental import pallas as pl
from jax.experimental.pallas import tpu as pltpu


def _op_kernel(idx_ref, scales_ref, a_ref, x_ref, o_ref):
    # Grid = (row, d, k_tile, op); (k_tile, op) are reduction axes accumulating
    # into the VMEM-resident f32 output block.
    c = pl.program_id(2)
    op = pl.program_id(3)

    a = a_ref[...]
    xv = x_ref[...]
    if a.dtype != xv.dtype:          # in-kernel tile cast: avoids a per-call
        a = a.astype(xv.dtype)       # full-stack cast of EVERY adjacency matrix
    s = scales_ref[op]               # ws[idx[op]] / num  (f32 scalar from SMEM)
    contrib = s * jnp.dot(a, xv, preferred_element_type=jnp.float32)

    first = (c == 0) & (op == 0)

    @pl.when(first)
    def _():
        o_ref[...] = contrib         # first reduction step: plain write

    @pl.when(jnp.logical_not(first))
    def _():
        o_ref[...] += contrib


_TM_CANDS = (2048, 1024, 512, 256, 128, 64, 32, 16)   # rows (sublane, bf16-aligned)
_TK_CANDS = (2048, 1024, 512, 256, 128)               # contraction (lanes)
_TD_CANDS = (4096, 2048, 1024, 512, 256, 128)         # features (lanes)


def _pick_tile(n, candidates):
    for c in candidates:
        if c <= n and n % c == 0:
            return c
    return n  # full-dim fallback (block == full array dim satisfies layout rule)


def _pick_row_tile(n, candidates):
    # Prefer >= 2 row tiles so the "parallel" row axis shards across the v7x
    # dual TensorCores (harmless on v5e/v6e), staying >= 16 rows for bf16
    # sublane packing.
    for c in candidates:
        if 16 <= c <= n // 2 and n % c == 0:
            return c
    return _pick_tile(n, candidates)


def op_forward(x, adjs, ws, k, *, seed=0, compute_dtype=jnp.bfloat16):
    """x: (N, D); adjs: (num_op, N, N) dense (store bf16 once for best perf);
    ws: (num_op,). Returns (N, D) float32."""
    num_op = int(ws.shape[0])
    num = num_op // k

    # Deterministic "random.sample" (Python-level in the reference; frozen at
    # trace time under jit).
    rng = random.Random(seed)
    idx = sorted(rng.sample(range(num_op), num))
    idx_arr = jnp.asarray(idx, dtype=jnp.int32)            # scalar prefetch -> SMEM
    scales = ws.astype(jnp.float32)[idx_arr] / float(num)  # (num,) f32 in SMEM

    N, D = x.shape

    # Lane-dense feature dim: pad D to a multiple of 128 (cheap: x only).
    D_pad = ((D + 127) // 128) * 128
    x_c = x.astype(compute_dtype)
    if D_pad != D:
        x_c = jnp.pad(x_c, ((0, 0), (0, D_pad - D)))

    # NOTE: intentionally no adjs.astype(...) here -- casting the full stack
    # every call moves far more HBM bytes than the kernel itself reads.
    adj_itemsize = jnp.dtype(adjs.dtype).itemsize
    x_itemsize = jnp.dtype(compute_dtype).itemsize

    tm = _pick_row_tile(N, _TM_CANDS)
    tk = _pick_tile(N, _TK_CANDS)
    td = _pick_tile(D_pad, _TD_CANDS)

    def footprint(tm_, tk_, td_):
        # double-buffered adj + x input blocks, double-buffered f32 out block
        return (2 * tm_ * tk_ * adj_itemsize
                + 2 * tk_ * td_ * x_itemsize
                + 2 * tm_ * td_ * 4)

    target = 28 << 20  # stays well under v7x's 64 MiB with headroom
    while footprint(tm, tk, td) > target:
        if td > 128 and D_pad % (td // 2) == 0 and (td // 2) % 128 == 0:
            td //= 2
        elif tk > 128 and N % (tk // 2) == 0 and (tk // 2) % 128 == 0:
            tk //= 2
        elif tm > 16 and N % (tm // 2) == 0 and (tm // 2) % 8 == 0:
            tm //= 2
        else:
            break

    n_rt, n_dt, n_kt = N // tm, D_pad // td, N // tk
    vmem_limit = int(min(60 << 20,
                         max(32 << 20, 2 * footprint(tm, tk, td) + (4 << 20))))

    out = pl.pallas_call(
        _op_kernel,
        out_shape=jax.ShapeDtypeStruct((N, D_pad), jnp.float32),
        grid_spec=pltpu.PrefetchScalarGridSpec(
            num_scalar_prefetch=1,                 # idx_arr -> SMEM, feeds index_maps
            grid=(n_rt, n_dt, n_kt, num),          # op innermost: x tile not
                                                   # re-DMA'd per selected op
            in_specs=[
                pl.BlockSpec(memory_space=pltpu.MemorySpace.SMEM),        # scales
                pl.BlockSpec((None, tm, tk),
                             lambda r, d, c, o, idx: (idx[o], r, c)),     # adjs[idx[o]]
                pl.BlockSpec((tk, td), lambda r, d, c, o, idx: (c, d)),   # x tile
            ],
            out_specs=pl.BlockSpec((tm, td), lambda r, d, c, o, idx: (r, d)),
        ),
        compiler_params=pltpu.CompilerParams(
            dimension_semantics=("parallel", "parallel", "arbitrary", "arbitrary"),
            vmem_limit_bytes=vmem_limit,
        ),
    )(idx_arr, scales, adjs, x_c)

    return out[:, :D] if D_pad != D else out


def _reference(x, adjs, ws, k, *, seed=0, compute_dtype=jnp.float32):
    num_op = int(ws.shape[0])
    num = num_op // k
    rng = random.Random(seed)
    idx = sorted(rng.sample(range(num_op), num))
    xh = x.astype(compute_dtype).astype(jnp.float32)
    ah = adjs.astype(compute_dtype).astype(jnp.float32)
    acc = jnp.zeros_like(xh)
    for i in idx:
        acc = acc + ws[i].astype(jnp.float32) * jnp.dot(
            ah[i], xh, preferred_element_type=jnp.float32,
            precision=jax.lax.Precision.HIGHEST)
    return acc / num


if __name__ == "__main__":
    key = jax.random.PRNGKey(0)
    k_x, k_a, k_w, k_m = jax.random.split(key, 4)

    num_op, kk = 4, 2      # num_op candidate ops, keep num_op // k of them
    N, D = 16, 32          # N graph nodes, D features

    x = jax.random.normal(k_x, (N, D), jnp.float32)
    # Sparse-ish adjacency matrices (densified for the kernel).
    dense = jax.random.normal(k_a, (num_op, N, N), jnp.float32)
    sparsity = (jax.random.uniform(k_m, (num_op, N, N)) < 0.25).astype(jnp.float32)
    adjs_f32 = dense * sparsity
    ws = jax.random.uniform(k_w, (num_op,), jnp.float32)

    # Persistent bf16 adjacency storage: cast ONCE at model setup, never per call.
    adjs = adjs_f32.astype(jnp.bfloat16)

    out = op_forward(x, adjs, ws, kk, seed=0)
    out = jax.block_until_ready(out)
    assert out.shape == (N, D) and out.dtype == jnp.float32

    # Kernel correctness vs a reference evaluated at the same bf16 input
    # precision the kernel streams at (f32 accumulation in both).
    ref_bf16 = _reference(x, adjs_f32, ws, kk, seed=0, compute_dtype=jnp.bfloat16)
    max_err = float(jnp.max(jnp.abs(out - ref_bf16)))
    assert jnp.allclose(out, ref_bf16, atol=2e-3, rtol=2e-3), max_err

    # Sanity vs the full-f32 reference (bf16 quantization-level tolerance).
    ref_f32 = _reference(x, adjs_f32, ws, kk, seed=0, compute_dtype=jnp.float32)
    assert jnp.allclose(out, ref_f32, atol=1e-1, rtol=1e-1)

    print("KERNEL_OK")
</pallas_src>

<mosaic_0001>
module attributes {stable_mosaic.version = 11 : i64} {
  func.func @_op_kernel(%arg0: i32, %arg1: i32, %arg2: i32, %arg3: i32, %arg4: memref<2xi32, #tpu.memory_space<smem>>, %arg5: memref<2xf32, #tpu.memory_space<smem>>, %arg6: memref<1x16x16xbf16, #tpu.memory_space<vmem>>, %arg7: memref<16x128xbf16, #tpu.memory_space<vmem>>, %arg8: memref<16x128xf32, #tpu.memory_space<vmem>>) attributes {dimension_semantics = [#tpu.dimension_semantics<parallel>, #tpu.dimension_semantics<parallel>, #tpu.dimension_semantics<arbitrary>, #tpu.dimension_semantics<arbitrary>], iteration_bounds = array<i64: 1, 1, 1, 2>, scalar_prefetch = 1 : i64, scratch_operands = 0 : i64, tpu.core_type = #tpu.core_type<tc>, window_params = [{transform_indices = @transform_0, window_bounds = array<i64: 2>}, {transform_indices = @transform_1, window_bounds = array<i64: 1, 16, 16>}, {transform_indices = @transform_2, window_bounds = array<i64: 16, 128>}, {transform_indices = @transform_3, window_bounds = array<i64: 16, 128>}]} {
    %c0 = arith.constant 0 : index
    %c0_0 = arith.constant 0 : index
    %c0_1 = arith.constant 0 : index
    %0 = vector.load %arg6[%c0, %c0_0, %c0_1] : memref<1x16x16xbf16, #tpu.memory_space<vmem>>, vector<1x16x16xbf16>
    %1 = vector.shape_cast %0 : vector<1x16x16xbf16> to vector<16x16xbf16>
    %c0_2 = arith.constant 0 : index
    %c0_3 = arith.constant 0 : index
    %2 = vector.load %arg7[%c0_2, %c0_3] : memref<16x128xbf16, #tpu.memory_space<vmem>>, vector<16x128xbf16>
    %3 = arith.index_cast %arg3 : i32 to index
    %4 = memref.load %arg5[%3] : memref<2xf32, #tpu.memory_space<smem>>
    %cst = arith.constant dense<0.000000e+00> : vector<16x128xf32>
    %5 = tpu.matmul %1, %2, %cst {dimension_numbers = #tpu.dot_dimension_numbers<[1], [0], [0], [1], [0, 0, 1, 1], [], []>} : vector<16x16xbf16>, vector<16x128xbf16>, vector<16x128xf32> -> vector<16x128xf32>
    %6 = vector.broadcast %4 : f32 to vector<16x128xf32>
    %7 = arith.mulf %6, %5 : vector<16x128xf32>
    %c0_i32 = arith.constant 0 : i32
    %8 = arith.cmpi eq, %arg2, %c0_i32 : i32
    %c0_i32_4 = arith.constant 0 : i32
    %9 = arith.cmpi eq, %arg3, %c0_i32_4 : i32
    %10 = arith.andi %8, %9 : i1
    %11 = arith.extui %10 : i1 to i32
    %c0_i32_5 = arith.constant 0 : i32
    %12 = arith.cmpi ne, %11, %c0_i32_5 : i32
    scf.if %12 {
      %c0_7 = arith.constant 0 : index
      %c0_8 = arith.constant 0 : index
      %16 = vector.load %arg8[%c0_7, %c0_8] : memref<16x128xf32, #tpu.memory_space<vmem>>, vector<16x128xf32>
      tpu.vector_store %arg8[%c0_7, %c0_8], %7 {strides = array<i32>} : memref<16x128xf32, #tpu.memory_space<vmem>>, vector<16x128xf32>,
    } else {
    }
    %true = arith.constant true
    %13 = arith.xori %10, %true : i1
    %14 = arith.extui %13 : i1 to i32
    %c0_i32_6 = arith.constant 0 : i32
    %15 = arith.cmpi ne, %14, %c0_i32_6 : i32
    scf.if %15 {
      %c0_7 = arith.constant 0 : index
      %c0_8 = arith.constant 0 : index
      %16 = vector.load %arg8[%c0_7, %c0_8] : memref<16x128xf32, #tpu.memory_space<vmem>>, vector<16x128xf32>
      %17 = arith.addf %16, %7 : vector<16x128xf32>
      %c0_9 = arith.constant 0 : index
      %c0_10 = arith.constant 0 : index
      %18 = vector.load %arg8[%c0_9, %c0_10] : memref<16x128xf32, #tpu.memory_space<vmem>>, vector<16x128xf32>
      tpu.vector_store %arg8[%c0_9, %c0_10], %17 {strides = array<i32>} : memref<16x128xf32, #tpu.memory_space<vmem>>, vector<16x128xf32>,
    } else {
    }
    return
  }
  func.func @transform_0(%arg0: i32, %arg1: i32, %arg2: i32, %arg3: i32, %arg4: memref<2xi32, #tpu.memory_space<smem>>) -> i32 {
    %c0_i32 = arith.constant 0 : i32
    %c0_i32_0 = arith.constant 0 : i32
    return %c0_i32 : i32
  }
  func.func @transform_1(%arg0: i32, %arg1: i32, %arg2: i32, %arg3: i32, %arg4: memref<2xi32, #tpu.memory_space<smem>>) -> (i32, i32, i32) {
    %0 = arith.index_cast %arg3 : i32 to index
    %1 = memref.load %arg4[%0] : memref<2xi32, #tpu.memory_space<smem>>
    %c0_i32 = arith.constant 0 : i32
    return %1, %arg0, %arg2 : i32, i32, i32
  }
  func.func @transform_2(%arg0: i32, %arg1: i32, %arg2: i32, %arg3: i32, %arg4: memref<2xi32, #tpu.memory_space<smem>>) -> (i32, i32) {
    %c0_i32 = arith.constant 0 : i32
    return %arg2, %arg1 : i32, i32
  }
  func.func @transform_3(%arg0: i32, %arg1: i32, %arg2: i32, %arg3: i32, %arg4: memref<2xi32, #tpu.memory_space<smem>>) -> (i32, i32) {
    %c0_i32 = arith.constant 0 : i32
    return %arg0, %arg1 : i32, i32
  }
}

</mosaic_0001>

<llo_original>
// kernel: tpu_custom_call.1
$region0: #{tpu_custom_call.1}
  #allocation0 [shape = 'u32[]', space=smem, size = 0x4, offset = 0x4, fixed_abs, tag = 'smem constant byte address 0x4 - core index']
  #allocation1 [shape = 'u32[144,128]{1,0:T(1,128)}', space=vmem, size = 0x12000, scoped, tag = 'internal scratch']
  #allocation2 [shape = 's32[1]{0}', space=sflag, size = 0x4, scoped, tag = 'scoped memory for tpu_custom_call.1']
  #allocation3 [shape = 'u8[512]{0}', space=smem, size = 0x200, scoped, tag = 'prefetched SMEM operand 0']
  %s0 = inlined_call_operand.hbm [shape: s32[2], index: 0, kind: input, shape index: {}]
  %s1 = inlined_call_operand.vmem [shape: f32[2], index: 1, kind: input, shape index: {}]
  %s2 = inlined_call_operand.hbm [shape: bf16[4,16,16], index: 2, kind: input, shape index: {}]
  %s3 = inlined_call_operand.vmem [shape: bf16[16,128], index: 3, kind: input, shape index: {}]
  %s4 = inlined_call_operand.hbm [shape: f32[16,128], index: 4, kind: output, shape index: {}]
  %s5 = sld [smem:[#allocation0]]
  $region61: #{tpu_custom_call.1} parent=0
    _
  %s7 = ssub.s32 1, %s5
  %s8 = scalar_select 0, %s7, %s5
  %10 = dma.hbm_to_smem %s0, 16, [#allocation3], [#allocation2]
  %11 = dma.done [#allocation2], 16
  %12 = sfence
  $region1: #{tpu_custom_call.1} parent=0
    #allocation4 [shape = 'u8[512]{0}', space=smem, size = 0x200, scoped, tag = 'input window, operand 1, single buffered']
    #allocation5 [shape = 's32[2]{0}', space=sflag, size = 0x8, scoped, tag = 'scoped memory for tpu_custom_call.1']
    #allocation6 [shape = 's32[2]{0}', space=sflag, size = 0x8, scoped, tag = 'scoped memory for tpu_custom_call.1']
    #allocation7 [shape = 's32[2]{0}', space=sflag, size = 0x8, scoped, tag = 'scoped memory for tpu_custom_call.1']
    #allocation8 [shape = 'u8[8192]{0}', space=vmem, size = 0x2000, scoped, tag = 'input window, operand 2']
    #allocation9 [shape = 'u8[8192]{0}', space=vmem, size = 0x2000, scoped, tag = 'output window, operand 0, single buffered']
    %13 = vsyncpa [#allocation7], 0
    %14 = vsyncpa [#allocation5], 0
    %s15 = scalar_lea.sflag [#allocation5], 1
    %16 = vsyncpa %s15, 0
    %17 = vsyncpa [#allocation6], 0
    loop: start=0, step=1, limit=4
    $region2: #{tpu_custom_call.1} parent=1 // loop_pre_header
      _
    $region3: #{tpu_custom_call.1} parent=1 // loop_header
      %s19 = sphi 0, %s23
      %p20 = scmp.ge.s32.totalorder %s19, 4
      %s26 = sphi 0, %s52
      %s27 = sphi 0, %s48
      %s28 = sphi 0, %s44
      %s29 = sphi 0, %s40
      %s30 = sphi 0, %s26
      %s31 = sphi 0, %s27
      %s32 = sphi 0, %s28
      %s33 = sphi 0, %s29
      %s34 = sphi 0, %s30
      %s35 = sphi 0, %s31
      %s36 = sphi 0, %s32
      %s37 = sphi 0, %s33
      %s53 = sphi 0, %s53
      %s55 = sphi 0, %s53
      %s56 = sphi 0, %s55
      %s70 = sphi 0, %s56
      %s82 = sphi 0, %s84
      %s85 = sphi 0, %s82
      %s86 = sphi 0, %s85
      %s102 = sphi 0, %s86
      %s110 = sphi 0, %s112
      %s113 = sphi 0, %s110
      %s114 = sphi 0, %s113
      %s130 = sphi 0, %s114
      %s138 = sphi 0, %s140
      %s141 = sphi 0, %s138
      %s142 = sphi 0, %s141
      %s158 = sphi 0, %s142
    $region4: #{tpu_custom_call.1} parent=1 // loop_header_branch
      %22 = sbr.rel (%p20) target = $region8
    $region5: #{tpu_custom_call.1} parent=1 // loop_body
      %s24 = ssub.s32 %s19, 1
      %s25 = ssub.s32 %s19, 2
      %s38 = sadd.s32 1, %s29
      %p39 = scmp.ge.s32.totalorder %s38, 2
      %s40 = scalar_select %p39, 0, %s38
      %s41 = sadd.s32 1, %s28
      %s42 = scalar_select %p39, %s41, %s28
      %p43 = scmp.ge.s32.totalorder %s42, 1
      %s44 = scalar_select %p43, 0, %s42
      %s45 = sadd.s32 1, %s27
      %s46 = scalar_select %p43, %s45, %s27
      %p47 = scmp.ge.s32.totalorder %s46, 1
      %s48 = scalar_select %p47, 0, %s46
      %s49 = sadd.s32 1, %s26
      %s50 = scalar_select %p47, %s49, %s26
      %p51 = scmp.ge.s32.totalorder %s50, 1
      %s52 = scalar_select %p51, 0, %s50
      %s54 = sadd.s32 %s53, 1
      %p57 = scmp.eq.s32.totalorder %s19, 1
      %p58 = scmp.ne.s32.totalorder %s53, %s55
      %p59 = scmp.eq.s32.totalorder %s19, 0
      %p60 = por %p58, %p59
      %p61 = scmp.ne.s32.totalorder %s53, %s55
      %p62 = scmp.eq.s32.totalorder %s24, 1
      %p63 = por %p61, %p62
      %p64 = scmp.ne.s32.totalorder %s55, %s56
      %p65 = scmp.eq.s32.totalorder %s24, 0
      %p66 = por %p64, %p65
      %p67 = scmp.ne.s32.totalorder %s55, %s56
      %p68 = scmp.eq.s32.totalorder %s25, 1
      %p69 = por %p67, %p68
      %p71 = scmp.ne.s32.totalorder %s56, %s70
      %p72 = scmp.eq.s32.totalorder %s25, 0
      %p73 = por %p71, %p72
      %s74 = sld [smem:[#allocation3 + %s29]]
      %s75 = sld [smem:[#allocation3 + %s40]]
      %s76 = ssub.s32 %s74, %s75
      %s77 = ssub.s32 %s26, %s52
      %s78 = sor.u32 %s76, %s77
      %s79 = ssub.s32 %s28, %s44
      %s80 = sor.u32 %s78, %s79
      %p81 = scmp.eq.s32.totalorder %s80, 0
      %s83 = sadd.s32 %s82, 1
      %s84 = scalar_select %p81, %s82, %s83
      %p87 = pneg %p81
      %p88 = scmp.eq.s32.totalorder %s19, 1
      %p89 = por %p87, %p88
      %p90 = scmp.ne.s32.totalorder %s82, %s85
      %p91 = scmp.eq.s32.totalorder %s19, 0
      %p92 = por %p90, %p91
      %p93 = scmp.ne.s32.totalorder %s82, %s85
      %p94 = scmp.eq.s32.totalorder %s24, 1
      %p95 = por %p93, %p94
      %p96 = scmp.ne.s32.totalorder %s85, %s86
      %p97 = scmp.eq.s32.totalorder %s24, 0
      %p98 = por %p96, %p97
      %p99 = scmp.ne.s32.totalorder %s85, %s86
      %p100 = scmp.eq.s32.totalorder %s25, 1
      %p101 = por %p99, %p100
      %p103 = scmp.ne.s32.totalorder %s86, %s102
      %p104 = scmp.eq.s32.totalorder %s25, 0
      %p105 = por %p103, %p104
      %s106 = ssub.s32 %s28, %s44
      %s107 = ssub.s32 %s27, %s48
      %s108 = sor.u32 %s106, %s107
      %p109 = scmp.eq.s32.totalorder %s108, 0
      %s111 = sadd.s32 %s110, 1
      %s112 = scalar_select %p109, %s110, %s111
      %p115 = pneg %p109
      %p116 = scmp.eq.s32.totalorder %s19, 1
      %p117 = por %p115, %p116
      %p118 = scmp.ne.s32.totalorder %s110, %s113
      %p119 = scmp.eq.s32.totalorder %s19, 0
      %p120 = por %p118, %p119
      %p121 = scmp.ne.s32.totalorder %s110, %s113
      %p122 = scmp.eq.s32.totalorder %s24, 1
      %p123 = por %p121, %p122
      %p124 = scmp.ne.s32.totalorder %s113, %s114
      %p125 = scmp.eq.s32.totalorder %s24, 0
      %p126 = por %p124, %p125
      %p127 = scmp.ne.s32.totalorder %s113, %s114
      %p128 = scmp.eq.s32.totalorder %s25, 1
      %p129 = por %p127, %p128
      %p131 = scmp.ne.s32.totalorder %s114, %s130
      %p132 = scmp.eq.s32.totalorder %s25, 0
      %p133 = por %p131, %p132
      %s134 = ssub.s32 %s26, %s52
      %s135 = ssub.s32 %s27, %s48
      %s136 = sor.u32 %s134, %s135
      %p137 = scmp.eq.s32.totalorder %s136, 0
      %s139 = sadd.s32 %s138, 1
      %s140 = scalar_select %p137, %s138, %s139
      %p143 = pneg %p137
      %p144 = scmp.eq.s32.totalorder %s19, 1
      %p145 = por %p143, %p144
      %p146 = scmp.ne.s32.totalorder %s138, %s141
      %p147 = scmp.eq.s32.totalorder %s19, 0
      %p148 = por %p146, %p147
      %p149 = scmp.ne.s32.totalorder %s138, %s141
      %p150 = scmp.eq.s32.totalorder %s24, 1
      %p151 = por %p149, %p150
      %p152 = scmp.ne.s32.totalorder %s141, %s142
      %p153 = scmp.eq.s32.totalorder %s24, 0
      %p154 = por %p152, %p153
      %p155 = scmp.ne.s32.totalorder %s141, %s142
      %p156 = scmp.eq.s32.totalorder %s25, 1
      %p157 = por %p155, %p156
      %p159 = scmp.ne.s32.totalorder %s142, %s158
      %p160 = scmp.eq.s32.totalorder %s25, 0
      %p161 = por %p159, %p160
      %p162 = scmp.le.s32.totalorder 1, %s19
      %p163 = scmp.lt.s32.totalorder %s19, 3
      %p164 = pnand %p162, %p163
      %p165 = pneg %p164
      // Predicated region
      $region9: #{tpu_custom_call.1} parent=5 // pred_check
        _
      $region10: #{tpu_custom_call.1} parent=5 // pred_check_branch
        %167 = sbr.rel (%p164) target = $region12
      $region11: #{tpu_custom_call.1} parent=5 // pred_region
        %s168 = ssub.s32 %s19, 1
        // Predicated region
        $region13: #{tpu_custom_call.1} parent=11 // pred_check
          %p169 = pneg %p66
        $region14: #{tpu_custom_call.1} parent=11 // pred_check_branch
          %171 = sbr.rel (%p169) target = $region16
        $region15: #{tpu_custom_call.1} parent=11 // pred_region
          %s173 = ssub.s32 16, 16
          %174 = vsyncadd [#allocation7], %s173
          %s176 = sshll.u32 %s1, 4
          %s177 = int_to_ptr.vmem [resolvable:$true] %s176
          %179 = dma.vmem_to_smem %s177, 16, [#allocation4], [#allocation7]
        $region16: #{tpu_custom_call.1} parent=11 // pred_fallthru
          _
        // Predicated region
        $region17: #{tpu_custom_call.1} parent=11 // pred_check
          %p180 = pneg %p126
        $region18: #{tpu_custom_call.1} parent=11 // pred_check_branch
          %182 = sbr.rel (%p180) target = $region20
        $region19: #{tpu_custom_call.1} parent=11 // pred_region
          %s183 = smul.u32 2, %s32
          %p184 = scmp.lt.s32.totalorder %s183, 1
          %s185 = scalar_select %p184, %s183, 1
          %p186 = scmp.lt.s32.totalorder %s31, 0
          %s187 = scalar_select %p186, %s31, 0
          %s188 = sadd.s32 %s187, %s185
          %s189 = smul.addr %s188, 4
          %s190 = scalar_lea.vmem %s3, %s189
          %s191 = smul.u32 2, %s32
        $region20: #{tpu_custom_call.1} parent=11 // pred_fallthru
          _
      $region12: #{tpu_custom_call.1} parent=5 // pred_fallthru
        _
      %p192 = scmp.lt.s32.totalorder %s19, 2
      // Predicated region
      $region21: #{tpu_custom_call.1} parent=5 // pred_check
        %p193 = pneg %p192
      $region22: #{tpu_custom_call.1} parent=5 // pred_check_branch
        %195 = sbr.rel (%p193) target = $region24
      $region23: #{tpu_custom_call.1} parent=5 // pred_region
        // Predicated region
        $region25: #{tpu_custom_call.1} parent=23 // pred_check
          %p196 = pneg %p92
        $region26: #{tpu_custom_call.1} parent=23 // pred_check_branch
          %198 = sbr.rel (%p196) target = $region28
        $region27: #{tpu_custom_call.1} parent=23 // pred_region
          %s199 = sand.u32 %s82, 1
          %s200 = scalar_lea.sflag [#allocation5], %s199
          %s201 = sand.u32 %s82, 1
          %s202 = smul.addr %s201, 8
          %s203 = scalar_lea.vmem [#allocation8], %s202
          %s204 = sld [smem:[#allocation3 + %s29]]
          %s205 = smul.u32 2, %s26
          %s207 = ssub.s32 128, 128
          %208 = vsyncadd %s200, %s207
          %s209 = sadd.s32 %s28, %s205
          %s210 = smul.addr %s204, 2
          %s211 = sadd.s32 %s209, %s210
          %s212 = smul.addr %s211, 64
          %s213 = scalar_lea.hbm %s2, %s212
          %s214 = sshll.u32 %s203, 4
          %s215 = int_to_ptr.vmem [resolvable:$true] %s214
          %220 = dma.hbm_to_vmem [thread:$0]  %s213, 128, %s215, %s200, 64, 64, 4
        $region28: #{tpu_custom_call.1} parent=23 // pred_fallthru
          _
      $region24: #{tpu_custom_call.1} parent=5 // pred_fallthru
        _
      %p221 = scmp.le.s32.totalorder 1, %s19
      %p222 = scmp.lt.s32.totalorder %s19, 3
      %p223 = pnand %p221, %p222
      %p224 = pneg %p223
      // Predicated region
      $region29: #{tpu_custom_call.1} parent=5 // pred_check
        _
      $region30: #{tpu_custom_call.1} parent=5 // pred_check_branch
        %226 = sbr.rel (%p223) target = $region32
      $region31: #{tpu_custom_call.1} parent=5 // pred_region
        %s227 = ssub.s32 %s19, 1
        // Predicated region
        $region33: #{tpu_custom_call.1} parent=31 // pred_check
          %p228 = pneg %p66
        $region34: #{tpu_custom_call.1} parent=31 // pred_check_branch
          %230 = sbr.rel (%p228) target = $region36
        $region35: #{tpu_custom_call.1} parent=31 // pred_region
          %231 = dma.done [#allocation7], 16
        $region36: #{tpu_custom_call.1} parent=31 // pred_fallthru
          _
        %s232 = sand.u32 %s85, 1
        %s233 = scalar_lea.sflag [#allocation5], %s232
        %s234 = sand.u32 %s85, 1
        %s235 = smul.addr %s234, 8
        %s236 = scalar_lea.vmem [#allocation8], %s235
        // Predicated region
        $region37: #{tpu_custom_call.1} parent=31 // pred_check
          %p237 = pneg %p98
        $region38: #{tpu_custom_call.1} parent=31 // pred_check_branch
          %239 = sbr.rel (%p237) target = $region40
        $region39: #{tpu_custom_call.1} parent=31 // pred_region
          %240 = dma.done %s233, 128
        $region40: #{tpu_custom_call.1} parent=31 // pred_fallthru
          _
        %241 = sfence
        %p242 = pneg %p66
        %p243 = pneg %p63
        %s244 = sand.u32 %s85, 1
        %s245 = scalar_lea.sflag [#allocation5], %s244
        %s246 = sand.u32 %s85, 1
        %s247 = smul.addr %s246, 8
        %s248 = scalar_lea.vmem [#allocation8], %s247
        %p249 = pneg %p98
        %p250 = pneg %p95
        %s251 = smul.u32 2, %s32
        %p252 = scmp.lt.s32.totalorder %s251, 1
        %s253 = scalar_select %p252, %s251, 1
        %p254 = scmp.lt.s32.totalorder %s31, 0
        %s255 = scalar_select %p254, %s31, 0
        %s256 = sadd.s32 %s255, %s253
        %s257 = smul.addr %s256, 4
        %s258 = scalar_lea.vmem %s3, %s257
        %p259 = pneg %p126
        %p260 = pneg %p123
        %p261 = pneg %p154
        %p262 = pneg %p151
        %s263 = sld [smem:[#allocation3 + %s33]]
        %s264 = smul.u32 2, %s30
        %s265 = smul.u32 2, %s32
        %p266 = scmp.lt.s32.totalorder %s265, 1
        %s267 = scalar_select %p266, %s265, 1
        %p268 = scmp.lt.s32.totalorder %s31, 0
        %s269 = scalar_select %p268, %s31, 0
        %s270 = sadd.s32 %s269, %s267
        %s271 = smul.addr %s270, 4
        %s272 = scalar_lea.vmem %s3, %s271
        %s273 = smul.u32 2, %s32
        %s274 = smul.u32 2, %s30
        %v276 = vld [vmem:[%s236] sm:$0xf]
        %v277 = vld [vmem:[%s236 + $0x4] sm:$0xf]
        %v278 = vld [vmem:[%s272] sm:$0xf]
        %v279 = vld [vmem:[%s272 + $0x4] sm:$0xf]
        %s280 = sld [smem:[#allocation4 + %s33]]
        %v283 = vunpack.c.l.b16 %v276
        %v284 = vunpack.c.l.b16 %v277
        %v285 = vpack.c.b16 %v284, %v283
        %v288 = vunpack.c.l.b16 %v278
        %v289 = vunpack.c.l.b16 %v279
        %v290 = vpack.c.b16 %v289, %v288
        %vm292 = vcmask 130048
        %v294 = vsel %vm292, %v285, 0
        %296 = vmatprep.subr.bf16.mxu0 0
        %297 = vmatpush1.bf16.msra.mxu0 %v290
        %298 = vmatprep.subr.bf16.mxu0 0
        %299 = vmatpush1.bf16.msra.mxu0 0
        %300 = vmatprep.subr.bf16.mxu0 0
        %301 = vmatpush1.bf16.msra.mxu0 0
        %302 = vmatprep.subr.bf16.mxu0 0
        %303 = vmatpush1.bf16.msra.mxu0 0
        %304 = vmatprep.subr.bf16.mxu0 0
        %305 = vmatpush1.bf16.msra.mxu0 0
        %306 = vmatprep.subr.bf16.mxu0 0
        %307 = vmatpush1.bf16.msra.mxu0 0
        %308 = vmatprep.subr.bf16.mxu0 0
        %309 = vmatpush1.bf16.msra.mxu0 0
        %310 = vmatprep.subr.bf16.mxu0 0
        %311 = vmatpush1.bf16.msra.mxu0 0
        %312 = vmatprep.subr.bf16.mxu0 0
        %313 = vmatpush1.bf16.msra.mxu0 0
        %314 = vmatprep.subr.bf16.mxu0 0
        %315 = vmatpush1.bf16.msra.mxu0 0
        %316 = vmatprep.subr.bf16.mxu0 0
        %317 = vmatpush1.bf16.msra.mxu0 0
        %318 = vmatprep.subr.bf16.mxu0 0
        %319 = vmatpush1.bf16.msra.mxu0 0
        %320 = vmatprep.subr.bf16.mxu0 0
        %321 = vmatpush1.bf16.msra.mxu0 0
        %322 = vmatprep.subr.bf16.mxu0 0
        %323 = vmatpush1.bf16.msra.mxu0 0
        %324 = vmatprep.subr.bf16.mxu0 0
        %325 = vmatpush1.bf16.msra.mxu0 0
        %326 = vmatprep.subr.bf16.mxu0 0
        %327 = vmatpush1.bf16.msra.mxu0 0
        %328 = vmatprep.mubr.bf16.mxu0 0
        %329 = vmatmul.mubr.bf16.gmra.mrb[0].mxu0 %v294
        %v330 = vpop.f32.mrb[0].mxu0
        %v331 = vadd.f32 0.0, %v330
        %v332 = vpop.f32.mrb[0].mxu0
        %v333 = vpop.f32.mrb[0].mxu0
        %v334 = vadd.f32 0.0, %v333
        %v335 = vpop.f32.mrb[0].mxu0
        %336 = vdwg.mxu0
        %v337 = vstv %s280
        %v338 = vmul.f32 %v337, %v331
        %v339 = vmul.f32 %v337, %v334
        %p340 = scmp.eq.s32.totalorder %s32, 0
        %p341 = scmp.eq.s32.totalorder %s33, 0
        %p342 = pnand %p340, %p341
        %p343 = pneg %p342
        // Predicated region
        $region41: #{tpu_custom_call.1} parent=31 // pred_check
          _
        $region42: #{tpu_custom_call.1} parent=31 // pred_check_branch
          %345 = sbr.rel (%p342) target = $region44
        $region43: #{tpu_custom_call.1} parent=31 // pred_region
          %346 = vst [vmem:[#allocation9] sm:$0xff] %v338
          %347 = vst [vmem:[#allocation9 + $0x8] sm:$0xff] %v339
        $region44: #{tpu_custom_call.1} parent=31 // pred_fallthru
          _
        %p348 = pneg %p343
        // Predicated region
        $region45: #{tpu_custom_call.1} parent=31 // pred_check
          _
        $region46: #{tpu_custom_call.1} parent=31 // pred_check_branch
          %350 = sbr.rel (%p343) target = $region48
        $region47: #{tpu_custom_call.1} parent=31 // pred_region
          %v351 = vld [vmem:[#allocation9] sm:$0xff]
          %v352 = vld [vmem:[#allocation9 + $0x8] sm:$0xff]
          %v353 = vadd.f32 %v351, %v338
          %v354 = vadd.f32 %v352, %v339
          %355 = vst [vmem:[#allocation9] sm:$0xff] %v353
          %356 = vst [vmem:[#allocation9 + $0x8] sm:$0xff] %v354
        $region48: #{tpu_custom_call.1} parent=31 // pred_fallthru
          _
        // Predicated region
        $region49: #{tpu_custom_call.1} parent=31 // pred_check
          %p357 = pneg %p151
        $region50: #{tpu_custom_call.1} parent=31 // pred_check_branch
          %359 = sbr.rel (%p357) target = $region52
        $region51: #{tpu_custom_call.1} parent=31 // pred_region
          %s360 = smul.u32 2, %s30
          %s362 = ssub.s32 256, 256
          %363 = vsyncadd [#allocation6], %s362
          %s364 = sadd.s32 %s31, %s360
          %s365 = smul.addr %s364, 128
          %s366 = scalar_lea.hbm %s4, %s365
          %s367 = sshll.u32 [#allocation9], 4
          %s368 = int_to_ptr.vmem [resolvable:$true] %s367
          %373 = dma.vmem_to_hbm [thread:$0]  %s368, 256, %s366, [#allocation6], 128, 128, 8
        $region52: #{tpu_custom_call.1} parent=31 // pred_fallthru
          _
        // Predicated region
        $region53: #{tpu_custom_call.1} parent=31 // pred_check
          %p374 = pneg %p151
        $region54: #{tpu_custom_call.1} parent=31 // pred_check_branch
          %376 = sbr.rel (%p374) target = $region56
        $region55: #{tpu_custom_call.1} parent=31 // pred_region
          %377 = dma.done [#allocation6], 256
        $region56: #{tpu_custom_call.1} parent=31 // pred_fallthru
          _
      $region32: #{tpu_custom_call.1} parent=5 // pred_fallthru
        _
      %p378 = scmp.le.s32.totalorder 2, %s19
      // Predicated region
      $region57: #{tpu_custom_call.1} parent=5 // pred_check
        %p379 = pneg %p378
      $region58: #{tpu_custom_call.1} parent=5 // pred_check_branch
        %381 = sbr.rel (%p379) target = $region60
      $region59: #{tpu_custom_call.1} parent=5 // pred_region
        %s382 = ssub.s32 %s19, 2
      $region60: #{tpu_custom_call.1} parent=5 // pred_fallthru
        _
    $region6: #{tpu_custom_call.1} parent=1 // loop_footer
      %s23 = sadd.s32 1, %s19
    $region7: #{tpu_custom_call.1} parent=1 // loop_footer_branch
      %18 = sbr.rel target = $region3
    $region8: #{tpu_custom_call.1} parent=1 // loop_exit
      _
    %383 = vsyncpa [#allocation5], 1
    %s384 = scalar_lea.sflag [#allocation5], 1
    %385 = vsyncpa %s384, 1
    %386 = vsyncpa [#allocation6], 1
    %s387 = scalar_lea.sflag [#allocation6], 1
    %388 = vsyncpa %s387, 1
    %389 = vsyncpa [#allocation7], 1
    %s390 = scalar_lea.sflag [#allocation7], 1
    %391 = vsyncpa %s390, 1

</llo_original>
